<compile_context>
chip_gen: v7x
topology: tpu7x:2x2x1
jax: 0.10.0
libtpu: 0.0.40
codegen_flags: <defaults>
</compile_context>

<pallas_src>
import jax
import jax.numpy as jnp
from jax.experimental import pallas as pl
from jax.experimental.pallas import tpu as pltpu


# ------------------------------ fused kernel --------------------------------

def _subunit_fused_kernel(ids_ref, mask_ref, table_ref, out_ref):
    """expander + learner + reducer via the counts-matmul formulation.

    ids_ref  : (bt, S)   int32   token ids (0 = padding row)
    mask_ref : (bt, S)   float32 1.0 = valid token, 0.0 = padding
    table_ref: (Vp, Hp)  bf16    R = ReLU(table @ W + b), zero-padded to (Vp, Hp)
    out_ref  : (bt, Hp)  float32 masked mean over S of R[id]
    """
    bt, s = ids_ref.shape
    vp, hp = table_ref.shape

    ids = ids_ref[...]                                            # (bt, S) int32
    mask = mask_ref[...]                                          # (bt, S) f32

    # Masked per-row vocab counts: C[b, v] = sum_s mask[b,s] * (ids[b,s] == v).
    # ids outside [0, Vp) simply never match (same silent-zero behavior as the
    # original one-hot formulation).  ids stay in their natural (bt, S) layout.
    iota_v = jax.lax.broadcasted_iota(jnp.int32, (bt, s, vp), 2)  # (bt, S, Vp)
    hit = (ids.reshape(bt, s, 1) == iota_v).astype(jnp.float32)   # (bt, S, Vp)
    counts = jnp.sum(hit * mask.reshape(bt, s, 1), axis=1)        # (bt, Vp)

    # Masked SUM of ReLU(emb @ W + b) == counts @ R  (single MXU matmul).
    # counts are small exact integers -> exact in bf16; accumulation is f32.
    summed = jnp.dot(counts.astype(table_ref.dtype), table_ref[...],
                     preferred_element_type=jnp.float32)          # (bt, Hp)

    denom = jnp.maximum(jnp.sum(mask, axis=1, keepdims=True), 1.0)  # (bt, 1)
    out_ref[...] = summed * (1.0 / denom)


# ------------------------------ wrapper --------------------------------------

_VMEM_BUDGET_BYTES = 40 * 1024 * 1024   # conservative: fits v7x's 64 MiB w/ headroom
_TARGET_TILE_ROWS = 512                 # per-step matmul M-dim (multiple of 256)


def _vmem_bytes_estimate(bt, S, Vp, Hp, table_bytes, table_buffers):
    """Per-grid-step VMEM footprint: pipelined tiles + resident table + temps."""
    io = 2 * (bt * S * 4) * 2                      # ids + mask tiles, double-buffered
    out = 2 * (bt * Hp * 4)                        # f32 output tile, double-buffered
    tab = table_buffers * table_bytes              # resident fused table
    interm = bt * (S * Vp + Vp + 2 * Hp) * 4       # hit + counts + summed temporaries
    return io + out + tab + interm


def _make_table_spec(Vp, Hp):
    """Single-buffer the resident fused table (its index_map is constant)."""
    try:
        spec = pl.BlockSpec((Vp, Hp), lambda i: (0, 0),
                            pipeline_mode=pl.Buffered(1))
        return spec, 1
    except (TypeError, AttributeError):            # older BlockSpec signature
        return pl.BlockSpec((Vp, Hp), lambda i: (0, 0)), 2


def subunit_fused_forward(ids, mask2d, relu_table, hidden_size, *, batch_tile=None):
    """ids: (B, S) int32, mask2d: (B, S) f32 -> (B, hidden_size) f32."""
    B, S = ids.shape
    Vp, Hp = relu_table.shape
    assert Hp % 128 == 0, "fused table must be lane-dense (H padded to 128)"
    table_bytes = Vp * Hp * relu_table.dtype.itemsize

    table_spec, table_buffers = _make_table_spec(Vp, Hp)

    if batch_tile is None:
        bt = 8 * pl.cdiv(B, 8)                      # whole batch in one tile if small
        if bt > _TARGET_TILE_ROWS:
            bt = _TARGET_TILE_ROWS                  # large M per step, MXU-granular
        while bt > 8 and _vmem_bytes_estimate(
                bt, S, Vp, Hp, table_bytes, table_buffers) > _VMEM_BUDGET_BYTES:
            bt = max(8, 8 * ((bt // 2) // 8))
    else:
        bt = batch_tile

    Bp = bt * pl.cdiv(B, bt)                        # never drop trailing rows
    if Bp != B:
        ids = jnp.pad(ids, ((0, Bp - B), (0, 0)))          # padded ids -> 0
        mask2d = jnp.pad(mask2d, ((0, Bp - B), (0, 0)))    # padded rows fully masked

    vmem_limit = int(min(100 * 1024 * 1024,
                         max(8 * 1024 * 1024,
                             1.3 * _vmem_bytes_estimate(bt, S, Vp, Hp,
                                                        table_bytes, table_buffers))))

    out = pl.pallas_call(
        _subunit_fused_kernel,
        out_shape=jax.ShapeDtypeStruct((Bp, Hp), jnp.float32),
        grid=(Bp // bt,),
        in_specs=[
            pl.BlockSpec((bt, S), lambda i: (i, 0)),        # ids tile
            pl.BlockSpec((bt, S), lambda i: (i, 0)),        # mask tile
            table_spec,                                     # fused ReLU table (resident)
        ],
        out_specs=pl.BlockSpec((bt, Hp), lambda i: (i, 0)),  # lane-dense (Hp % 128 == 0)
        compiler_params=pltpu.CompilerParams(
            dimension_semantics=("parallel",),              # batch tiles independent
            vmem_limit_bytes=vmem_limit,
        ),
    )(ids.astype(jnp.int32), mask2d.astype(jnp.float32), relu_table)

    # Single combined slice: drop batch padding and lane padding in one copy.
    # (Output stays f32; emit bf16 here if the downstream consumer tolerates it.)
    return out[:B, :hidden_size]


# --------------------------- SubUnit_Layer port ------------------------------

class SubUnitLayerPallas:
    """Pallas port of fieldnn SubUnit_Layer (expander -> learner -> reducer chain,
    executed as one fused TPU kernel)."""

    def __init__(self, SubUnit_info, key, param_dtype=jnp.bfloat16):
        self.SubUnit_input_names = SubUnit_info['input_names']
        self.SubUnit_output_name = SubUnit_info['output_name']
        self.SubUnit_BasicNN_Config_List = SubUnit_info['SubUnit_BasicNN_Config_List']
        self.param_dtype = param_dtype
        self.params = {}
        self.expander_tag = None
        self.learner_tag = None
        chain = []

        for idx, cfg in enumerate(self.SubUnit_BasicNN_Config_List):
            nn_type_nn_name = cfg['nn_type_nn_name']
            basic = cfg['Basic_Config']
            tag = f'{idx}_{nn_type_nn_name}'
            if 'expander' in nn_type_nn_name:
                assert len(basic['input_names_nnlvl']) == 1
                p = basic['expander_para']
                key, sub = jax.random.split(key)
                table = jax.random.normal(
                    sub, (p['vocab_size'], p['embedding_size']), jnp.float32) * 0.02
                table = table.at[0].set(0.0)            # padding_idx = 0
                self.params[tag] = {'table': table}
                self.expander_tag = tag
                chain.append('expander')
            elif 'learner' in nn_type_nn_name:
                p = basic['learner_para']
                key, sub = jax.random.split(key)
                w = jax.random.normal(
                    sub, (p['input_size'], p['hidden_size']), jnp.float32) * 0.02
                b = jnp.zeros((1, p['hidden_size']), jnp.float32)
                self.params[tag] = {'w': w, 'b': b}
                self.learner_tag = tag
                chain.append('learner')
            elif 'reducer' in nn_type_nn_name:
                self.params[tag] = {}
                chain.append('reducer')
            elif 'merger' in nn_type_nn_name:
                # TODO(synk): Merger_Layer (multi-input concat/merge) is not exercised
                # by this synthetic single-field config.
                self.params[tag] = {}
                chain.append('merger')
            else:
                raise ValueError(f'Current BasicNN {nn_type_nn_name} is not available')

        if chain != ['expander', 'learner', 'reducer']:
            # TODO(synk): only the expander->learner->reducer chain has a fused kernel.
            raise NotImplementedError(f'Unsupported BasicNN chain for fused kernel: {chain}')

        # ---- fold learner (matmul + bias + ReLU) into the expander table -----
        table = self.params[self.expander_tag]['table']          # (V, E) f32
        w = self.params[self.learner_tag]['w']                   # (E, H) f32
        b = self.params[self.learner_tag]['b']                   # (1, H) f32
        # The per-token ReLU depends only on the vocab row, so pre-applying
        # bias + ReLU is exact; padded tokens (mask == 0) never reach the sum.
        rows = jnp.maximum(jnp.dot(table, w) + b, 0.0)           # (V, H) f32
        V, H = rows.shape
        Hp = 128 * pl.cdiv(H, 128)                               # lane-dense hidden
        Vp = 8 * pl.cdiv(V, 8)                                   # sublane-aligned vocab
        R = jnp.zeros((Vp, Hp), jnp.float32).at[:V, :H].set(rows)
        self.hidden_size = H
        self.vocab_size = V
        # NOTE: the fold quantizes ReLU(table@W + b) once to param_dtype; pass
        # param_dtype=jnp.float32 to keep the original two-stage f32 precision.
        self.fused_relu_table = R.astype(param_dtype)

    def __call__(self, SubUnit_input_names, RECFLD_TO_TENSOR):
        INPUTS_TO_INFODICT = {}
        output_name_nnlvl = None
        # Reproduce the dict-threading control flow of SubUnit_Layer.forward.
        # Intermediate stage tensors are never materialized: the whole chain
        # runs as one fused Pallas kernel below.
        for idx, cfg in enumerate(self.SubUnit_BasicNN_Config_List):
            basic = cfg['Basic_Config']
            input_names_nnlvl = basic['input_names_nnlvl']
            output_name_nnlvl = basic['output_name_nnlvl']
            if idx == 0:
                for tensor_name in input_names_nnlvl:
                    INPUTS_TO_INFODICT[tensor_name] = RECFLD_TO_TENSOR[tensor_name]
            else:
                for input_name in input_names_nnlvl:
                    assert input_name in INPUTS_TO_INFODICT
            INPUTS_TO_INFODICT[output_name_nnlvl] = {
                'info': None, 'leng_mask': None, 'fused_into_final': True}

        first_cfg = self.SubUnit_BasicNN_Config_List[0]['Basic_Config']
        first_in = RECFLD_TO_TENSOR[first_cfg['input_names_nnlvl'][0]]
        ids = first_in['info']                                   # (B, S) int32
        mask = first_in['leng_mask']                             # (B, S, 1) or (B, S)
        mask2d = mask[..., 0] if mask.ndim == 3 else mask

        out = subunit_fused_forward(ids, mask2d, self.fused_relu_table,
                                    self.hidden_size)            # (B, H) f32

        final_output_name_nnlvl = output_name_nnlvl
        INPUTS_TO_INFODICT[final_output_name_nnlvl] = {'info': out, 'leng_mask': None}

        SubUnit_output_name = self.SubUnit_output_name
        if SubUnit_output_name not in final_output_name_nnlvl:
            print(f'Mismatched SubUnit Output and Final NN Output: '
                  f'{final_output_name_nnlvl} vs {output_name_nnlvl}')
        info_dict = INPUTS_TO_INFODICT[final_output_name_nnlvl]
        return (SubUnit_output_name, info_dict)


# ----------------------------------- main ------------------------------------

if __name__ == "__main__":
    B, S, V, E, H = 2, 8, 32, 32, 32

    SubUnit_info = {
        'input_names': ['A@fld'],
        'output_name': 'A@fld_out',
        'SubUnit_BasicNN_Config_List': [
            {'nn_type_nn_name': 'expander_cateembed',
             'Basic_Config': {'input_names_nnlvl': ['A@fld'],
                              'output_name_nnlvl': 'A@fld_emb',
                              'expander_para': {'vocab_size': V, 'embedding_size': E}}},
            {'nn_type_nn_name': 'learner_linear',
             'Basic_Config': {'input_names_nnlvl': ['A@fld_emb'],
                              'output_name_nnlvl': 'A@fld_hid',
                              'learner_para': {'input_size': E, 'hidden_size': H}}},
            {'nn_type_nn_name': 'reducer_meanpool',
             'Basic_Config': {'input_names_nnlvl': ['A@fld_hid'],
                              'output_name_nnlvl': 'A@fld_out',
                              'reducer_para': {'method': 'mean'}}},
        ],
    }

    key = jax.random.PRNGKey(0)
    key, k_ids, k_params, k_ids2, k_ids3 = jax.random.split(key, 5)

    ids = jax.random.randint(k_ids, (B, S), 0, V, dtype=jnp.int32)
    ids = ids.at[:, 0].set(jnp.maximum(ids[:, 0], 1))        # at least one valid token
    mask = (ids > 0).astype(jnp.float32)[..., None]          # (B, S, 1), 1 = valid

    RECFLD_TO_TENSOR = {'A@fld': {'info': ids, 'leng_mask': mask}}

    layer = SubUnitLayerPallas(SubUnit_info, k_params)
    out_name, out_dict = layer(SubUnit_info['input_names'], RECFLD_TO_TENSOR)
    result = jax.block_until_ready(out_dict['info'])         # (B, H)

    # ------------------------- reference checks -----------------------------
    table = layer.params[layer.expander_tag]['table']        # f32 (V, E)
    w = layer.params[layer.learner_tag]['w']                 # f32 (E, H)
    b = layer.params[layer.learner_tag]['b']                 # f32 (1, H)

    def ref_from_rows(ids_, mask2d_, rows):                  # rows: (V, H) per-vocab values
        hid = jnp.take(rows, ids_, axis=0)                   # (B, S, H)
        m = mask2d_[..., None]
        return jnp.sum(hid * m, axis=1) / jnp.maximum(jnp.sum(m, axis=1), 1.0)

    rows_kernel = layer.fused_relu_table[:V, :H].astype(jnp.float32)  # the bf16 params used
    rows_orig = jnp.maximum(jnp.dot(table, w) + b, 0.0)               # original f32 math

    ref_exact = ref_from_rows(ids, mask[..., 0], rows_kernel)  # exact vs kernel parameters
    ref_orig = ref_from_rows(ids, mask[..., 0], rows_orig)     # original f32 module semantics

    assert out_name == SubUnit_info['output_name']
    assert result.shape == (B, H)
    assert jnp.allclose(result, ref_exact, atol=1e-5, rtol=1e-5)
    assert jnp.allclose(result, ref_orig, atol=1e-4, rtol=5e-2)   # bf16 fold quantization

    # --------- second case: non-multiple-of-8 batch, different S ------------
    B2, S2 = 20, 16
    ids2 = jax.random.randint(k_ids2, (B2, S2), 0, V, dtype=jnp.int32)
    ids2 = ids2.at[:, 0].set(jnp.maximum(ids2[:, 0], 1))
    mask2 = (ids2 > 0).astype(jnp.float32)[..., None]
    _, out_dict2 = layer(SubUnit_info['input_names'],
                         {'A@fld': {'info': ids2, 'leng_mask': mask2}})
    result2 = jax.block_until_ready(out_dict2['info'])       # (B2, H)
    ref2 = ref_from_rows(ids2, mask2[..., 0], rows_kernel)
    assert result2.shape == (B2, H)
    assert jnp.allclose(result2, ref2, atol=1e-5, rtol=1e-5)

    # --------- third case: large batch -> multi-step grid (512-row tiles) ---
    B3, S3 = 1024, 16
    ids3 = jax.random.randint(k_ids3, (B3, S3), 0, V, dtype=jnp.int32)
    ids3 = ids3.at[:, 0].set(jnp.maximum(ids3[:, 0], 1))
    mask3 = (ids3 > 0).astype(jnp.float32)[..., None]
    _, out_dict3 = layer(SubUnit_info['input_names'],
                         {'A@fld': {'info': ids3, 'leng_mask': mask3}})
    result3 = jax.block_until_ready(out_dict3['info'])       # (B3, H)
    ref3 = ref_from_rows(ids3, mask3[..., 0], rows_kernel)
    assert result3.shape == (B3, H)
    assert jnp.allclose(result3, ref3, atol=1e-5, rtol=1e-5)

    print("KERNEL_OK")
</pallas_src>

<mosaic_0001>
module attributes {stable_mosaic.version = 11 : i64} {
  func.func @_subunit_fused_kernel(%arg0: i32, %arg1: memref<8x8xi32, #tpu.memory_space<vmem>>, %arg2: memref<8x8xf32, #tpu.memory_space<vmem>>, %arg3: memref<32x128xbf16, #tpu.memory_space<vmem>>, %arg4: memref<8x128xf32, #tpu.memory_space<vmem>>) attributes {dimension_semantics = [#tpu.dimension_semantics<parallel>], iteration_bounds = array<i64: 1>, scalar_prefetch = 0 : i64, scratch_operands = 0 : i64, tpu.core_type = #tpu.core_type<tc>, window_params = [{transform_indices = @transform_0, window_bounds = array<i64: 8, 8>}, {transform_indices = @transform_1, window_bounds = array<i64: 8, 8>}, {pipeline_mode = #tpu.pipeline_mode<synchronous>, transform_indices = @transform_2, window_bounds = array<i64: 32, 128>}, {transform_indices = @transform_3, window_bounds = array<i64: 8, 128>}]} {
    %c0 = arith.constant 0 : index
    %c0_0 = arith.constant 0 : index
    %0 = vector.load %arg1[%c0, %c0_0] : memref<8x8xi32, #tpu.memory_space<vmem>>, vector<8x8xi32>
    %c0_1 = arith.constant 0 : index
    %c0_2 = arith.constant 0 : index
    %1 = vector.load %arg2[%c0_1, %c0_2] : memref<8x8xf32, #tpu.memory_space<vmem>>, vector<8x8xf32>
    %2 = tpu.iota {dimensions = array<i32: 2>} : vector<8x8x32xi32>
    %3 = vector.shape_cast %0 : vector<8x8xi32> to vector<8x8x1xi32>
    %4 = vector.broadcast %3 : vector<8x8x1xi32> to vector<8x8x32xi32>
    %5 = arith.cmpi eq, %4, %2 : vector<8x8x32xi32>
    %6 = arith.extui %5 : vector<8x8x32xi1> to vector<8x8x32xi32>
    %7 = arith.sitofp %6 : vector<8x8x32xi32> to vector<8x8x32xf32>
    %8 = vector.shape_cast %1 : vector<8x8xf32> to vector<8x8x1xf32>
    %9 = vector.broadcast %8 : vector<8x8x1xf32> to vector<8x8x32xf32>
    %10 = arith.mulf %7, %9 : vector<8x8x32xf32>
    %cst = arith.constant dense<0.000000e+00> : vector<8x32xf32>
    %11 = vector.multi_reduction <add>, %10, %cst [1] : vector<8x8x32xf32> to vector<8x32xf32>
    %12 = arith.truncf %11 : vector<8x32xf32> to vector<8x32xbf16>
    %c0_3 = arith.constant 0 : index
    %c0_4 = arith.constant 0 : index
    %13 = vector.load %arg3[%c0_3, %c0_4] : memref<32x128xbf16, #tpu.memory_space<vmem>>, vector<32x128xbf16>
    %cst_5 = arith.constant dense<0.000000e+00> : vector<8x128xf32>
    %14 = tpu.matmul %12, %13, %cst_5 {dimension_numbers = #tpu.dot_dimension_numbers<[1], [0], [0], [1], [0, 0, 1, 1], [], []>} : vector<8x32xbf16>, vector<32x128xbf16>, vector<8x128xf32> -> vector<8x128xf32>
    %cst_6 = arith.constant dense<0.000000e+00> : vector<8xf32>
    %15 = vector.multi_reduction <add>, %1, %cst_6 [1] : vector<8x8xf32> to vector<8xf32>
    %16 = vector.shape_cast %15 : vector<8xf32> to vector<8x1xf32>
    %cst_7 = arith.constant 1.000000e+00 : f32
    %17 = vector.broadcast %cst_7 : f32 to vector<8x1xf32>
    %18 = arith.maximumf %16, %17 : vector<8x1xf32>
    %cst_8 = arith.constant 1.000000e+00 : f32
    %19 = vector.broadcast %cst_8 : f32 to vector<8x1xf32>
    %20 = arith.divf %19, %18 : vector<8x1xf32>
    %21 = vector.broadcast %20 : vector<8x1xf32> to vector<8x128xf32>
    %22 = arith.mulf %14, %21 : vector<8x128xf32>
    %c0_9 = arith.constant 0 : index
    %c0_10 = arith.constant 0 : index
    %23 = vector.load %arg4[%c0_9, %c0_10] : memref<8x128xf32, #tpu.memory_space<vmem>>, vector<8x128xf32>
    tpu.vector_store %arg4[%c0_9, %c0_10], %22 {strides = array<i32>} : memref<8x128xf32, #tpu.memory_space<vmem>>, vector<8x128xf32>,
    return
  }
  func.func @transform_0(%arg0: i32) -> (i32, i32) {
    %c0_i32 = arith.constant 0 : i32
    %c0_i32_0 = arith.constant 0 : i32
    return %arg0, %c0_i32 : i32, i32
  }
  func.func @transform_1(%arg0: i32) -> (i32, i32) {
    %c0_i32 = arith.constant 0 : i32
    %c0_i32_0 = arith.constant 0 : i32
    return %arg0, %c0_i32 : i32, i32
  }
  func.func @transform_2(%arg0: i32) -> (i32, i32) {
    %c0_i32 = arith.constant 0 : i32
    %c0_i32_0 = arith.constant 0 : i32
    %c0_i32_1 = arith.constant 0 : i32
    return %c0_i32, %c0_i32_0 : i32, i32
  }
  func.func @transform_3(%arg0: i32) -> (i32, i32) {
    %c0_i32 = arith.constant 0 : i32
    %c0_i32_0 = arith.constant 0 : i32
    return %arg0, %c0_i32 : i32, i32
  }
}

</mosaic_0001>

<llo_original>
// kernel: tpu_custom_call.1
$region0: #{tpu_custom_call.1}
  #allocation0 [shape = 'u32[]', space=smem, size = 0x4, offset = 0x4, fixed_abs, tag = 'smem constant byte address 0x4 - core index']
  #allocation1 [shape = 'u32[144,128]{1,0:T(1,128)}', space=vmem, size = 0x12000, scoped, tag = 'internal scratch']
  %s0 = inlined_call_operand.hbm [shape: s32[8,8], index: 0, kind: input, shape index: {}]
  %s1 = inlined_call_operand.hbm [shape: f32[8,8], index: 1, kind: input, shape index: {}]
  %s2 = inlined_call_operand.hbm [shape: bf16[32,128], index: 2, kind: input, shape index: {}]
  %s3 = inlined_call_operand.hbm [shape: f32[8,128], index: 3, kind: output, shape index: {}]
  %s4 = sld [smem:[#allocation0]]
  $region34: #{tpu_custom_call.1} parent=0
    _
  %s6 = ssub.s32 1, %s4
  %s7 = scalar_select 0, %s6, %s4
  $region1: #{tpu_custom_call.1} parent=0
    #allocation2 [shape = 'u8[4096]{0}', space=vmem, size = 0x1000, scoped, tag = 'input window, operand 0, single buffered']
    #allocation3 [shape = 's32[1]{0}', space=sflag, size = 0x4, scoped, tag = 'scoped memory for tpu_custom_call.1']
    #allocation4 [shape = 's32[1]{0}', space=sflag, size = 0x4, scoped, tag = 'scoped memory for tpu_custom_call.1']
    #allocation5 [shape = 'u8[4096]{0}', space=vmem, size = 0x1000, scoped, tag = 'input window, operand 1, single buffered']
    #allocation6 [shape = 's32[1]{0}', space=sflag, size = 0x4, scoped, tag = 'scoped memory for tpu_custom_call.1']
    #allocation7 [shape = 'u8[8192]{0}', space=vmem, size = 0x2000, scoped, tag = 'input window, operand 2, single buffered']
    #allocation8 [shape = 'u8[4096]{0}', space=vmem, size = 0x1000, scoped, tag = 'output window, operand 0, single buffered']
    %8 = vsyncpa [#allocation3], 0
    %9 = vsyncpa [#allocation6], 0
    %10 = vsyncpa [#allocation4], 0
    // Predicated region
    $region2: #{tpu_custom_call.1} parent=1 // pred_check
      _
    $region3: #{tpu_custom_call.1} parent=1 // pred_check_branch
      %12 = sbr.rel (0) target = $region5
    $region4: #{tpu_custom_call.1} parent=1 // pred_region
      %s14 = ssub.s32 128, 128
      %15 = vsyncadd [#allocation3], %s14
      %s17 = sshll.u32 [#allocation2], 4
      %s18 = int_to_ptr.vmem [resolvable:$true] %s17
      %20 = dma.hbm_to_vmem [thread:$0]  %s0, 128, %s18, [#allocation3]
    $region5: #{tpu_custom_call.1} parent=1 // pred_fallthru
      _
    // Predicated region
    $region6: #{tpu_custom_call.1} parent=1 // pred_check
      _
    $region7: #{tpu_custom_call.1} parent=1 // pred_check_branch
      %22 = sbr.rel (0) target = $region9
    $region8: #{tpu_custom_call.1} parent=1 // pred_region
      %s24 = ssub.s32 128, 128
      %25 = vsyncadd [#allocation6], %s24
      %s27 = sshll.u32 [#allocation5], 4
      %s28 = int_to_ptr.vmem [resolvable:$true] %s27
      %30 = dma.hbm_to_vmem [thread:$0]  %s1, 128, %s28, [#allocation6]
    $region9: #{tpu_custom_call.1} parent=1 // pred_fallthru
      _
    // Predicated region
    $region10: #{tpu_custom_call.1} parent=1 // pred_check
      _
    $region11: #{tpu_custom_call.1} parent=1 // pred_check_branch
      %32 = sbr.rel (0) target = $region13
    $region12: #{tpu_custom_call.1} parent=1 // pred_region
      %s34 = ssub.s32 256, 256
      %35 = vsyncadd [#allocation6], %s34
      %s36 = sshll.u32 [#allocation7], 4
      %s37 = int_to_ptr.vmem [resolvable:$true] %s36
      %42 = dma.hbm_to_vmem [thread:$0]  %s2, 256, %s37, [#allocation6], 64, 64, 4
    $region13: #{tpu_custom_call.1} parent=1 // pred_fallthru
      _
    // Predicated region
    $region14: #{tpu_custom_call.1} parent=1 // pred_check
      _
    $region15: #{tpu_custom_call.1} parent=1 // pred_check_branch
      %44 = sbr.rel (0) target = $region17
    $region16: #{tpu_custom_call.1} parent=1 // pred_region
      %45 = dma.done [#allocation3], 128
    $region17: #{tpu_custom_call.1} parent=1 // pred_fallthru
      _
    // Predicated region
    $region18: #{tpu_custom_call.1} parent=1 // pred_check
      _
    $region19: #{tpu_custom_call.1} parent=1 // pred_check_branch
      %47 = sbr.rel (0) target = $region21
    $region20: #{tpu_custom_call.1} parent=1 // pred_region
      %48 = dma.done [#allocation6], 128
    $region21: #{tpu_custom_call.1} parent=1 // pred_fallthru
      _
    // Predicated region
    $region22: #{tpu_custom_call.1} parent=1 // pred_check
      _
    $region23: #{tpu_custom_call.1} parent=1 // pred_check_branch
      %50 = sbr.rel (0) target = $region25
    $region24: #{tpu_custom_call.1} parent=1 // pred_region
      %51 = dma.done [#allocation6], 256
    $region25: #{tpu_custom_call.1} parent=1 // pred_fallthru
      _
    %v53 = vld [vmem:[#allocation2] sm:$0xff]
    %v54 = vld [vmem:[#allocation5] sm:$0xff]
    %v55 = vlaneseq
    %v56 = vand.u32 %v55, 127
    %v57 = vlaneseq
    %v58 = vshrl.u32 %v57, 7
    %v59 = vsub.s32 0, %v58
    %v60 = vrot.slane %v53, %v59
    %62 = vbcast.lane.b32.xlu0 %v60, 256
    %v63 = vpop.permute.xlu0 %62
    %v64 = vlaneseq
    %v65 = vshrl.u32 %v64, 7
    %v66 = vsub.s32 1, %v65
    %v67 = vrot.slane %v53, %v66
    %69 = vbcast.lane.b32.xlu0 %v67, 256
    %v70 = vpop.permute.xlu0 %69
    %v71 = vlaneseq
    %v72 = vshrl.u32 %v71, 7
    %v73 = vsub.s32 2, %v72
    %v74 = vrot.slane %v53, %v73
    %76 = vbcast.lane.b32.xlu0 %v74, 256
    %v77 = vpop.permute.xlu0 %76
    %v78 = vlaneseq
    %v79 = vshrl.u32 %v78, 7
    %v80 = vsub.s32 3, %v79
    %v81 = vrot.slane %v53, %v80
    %83 = vbcast.lane.b32.xlu0 %v81, 256
    %v84 = vpop.permute.xlu0 %83
    %v85 = vlaneseq
    %v86 = vshrl.u32 %v85, 7
    %v87 = vsub.s32 4, %v86
    %v88 = vrot.slane %v53, %v87
    %90 = vbcast.lane.b32.xlu0 %v88, 256
    %v91 = vpop.permute.xlu0 %90
    %v92 = vlaneseq
    %v93 = vshrl.u32 %v92, 7
    %v94 = vsub.s32 5, %v93
    %v95 = vrot.slane %v53, %v94
    %97 = vbcast.lane.b32.xlu0 %v95, 256
    %v98 = vpop.permute.xlu0 %97
    %v99 = vlaneseq
    %v100 = vshrl.u32 %v99, 7
    %v101 = vsub.s32 6, %v100
    %v102 = vrot.slane %v53, %v101
    %104 = vbcast.lane.b32.xlu0 %v102, 256
    %v105 = vpop.permute.xlu0 %104
    %v106 = vlaneseq
    %v107 = vshrl.u32 %v106, 7
    %v108 = vsub.s32 7, %v107
    %v109 = vrot.slane %v53, %v108
    %111 = vbcast.lane.b32.xlu0 %v109, 256
    %v112 = vpop.permute.xlu0 %111
    %vm113 = vcmp.eq.s32.totalorder %v63, %v56
    %vm114 = vcmp.eq.s32.totalorder %v70, %v56
    %vm115 = vcmp.eq.s32.totalorder %v77, %v56
    %vm116 = vcmp.eq.s32.totalorder %v84, %v56
    %vm117 = vcmp.eq.s32.totalorder %v91, %v56
    %vm118 = vcmp.eq.s32.totalorder %v98, %v56
    %vm119 = vcmp.eq.s32.totalorder %v105, %v56
    %vm120 = vcmp.eq.s32.totalorder %v112, %v56
    %v121 = vsel %vm113, 1, 0
    %v122 = vsel %vm114, 1, 0
    %v123 = vsel %vm115, 1, 0
    %v124 = vsel %vm116, 1, 0
    %v125 = vsel %vm117, 1, 0
    %v126 = vsel %vm118, 1, 0
    %v127 = vsel %vm119, 1, 0
    %v128 = vsel %vm120, 1, 0
    %v129 = vcvt.s32.f32 %v121
    %v130 = vcvt.s32.f32 %v122
    %v131 = vcvt.s32.f32 %v123
    %v132 = vcvt.s32.f32 %v124
    %v133 = vcvt.s32.f32 %v125
    %v134 = vcvt.s32.f32 %v126
    %v135 = vcvt.s32.f32 %v127
    %v136 = vcvt.s32.f32 %v128
    %v137 = vlaneseq
    %v138 = vshrl.u32 %v137, 7
    %v139 = vsub.s32 0, %v138
    %v140 = vrot.slane %v54, %v139
    %142 = vbcast.lane.b32.xlu0 %v140, 256
    %v143 = vpop.permute.xlu0 %142
    %v144 = vlaneseq
    %v145 = vshrl.u32 %v144, 7
    %v146 = vsub.s32 1, %v145
    %v147 = vrot.slane %v54, %v146
    %149 = vbcast.lane.b32.xlu0 %v147, 256
    %v150 = vpop.permute.xlu0 %149
    %v151 = vlaneseq
    %v152 = vshrl.u32 %v151, 7
    %v153 = vsub.s32 2, %v152
    %v154 = vrot.slane %v54, %v153
    %156 = vbcast.lane.b32.xlu0 %v154, 256
    %v157 = vpop.permute.xlu0 %156
    %v158 = vlaneseq
    %v159 = vshrl.u32 %v158, 7
    %v160 = vsub.s32 3, %v159
    %v161 = vrot.slane %v54, %v160
    %163 = vbcast.lane.b32.xlu0 %v161, 256
    %v164 = vpop.permute.xlu0 %163
    %v165 = vlaneseq
    %v166 = vshrl.u32 %v165, 7
    %v167 = vsub.s32 4, %v166
    %v168 = vrot.slane %v54, %v167
    %170 = vbcast.lane.b32.xlu0 %v168, 256
    %v171 = vpop.permute.xlu0 %170
    %v172 = vlaneseq
    %v173 = vshrl.u32 %v172, 7
    %v174 = vsub.s32 5, %v173
    %v175 = vrot.slane %v54, %v174
    %177 = vbcast.lane.b32.xlu0 %v175, 256
    %v178 = vpop.permute.xlu0 %177
    %v179 = vlaneseq
    %v180 = vshrl.u32 %v179, 7
    %v181 = vsub.s32 6, %v180
    %v182 = vrot.slane %v54, %v181
    %184 = vbcast.lane.b32.xlu0 %v182, 256
    %v185 = vpop.permute.xlu0 %184
    %v186 = vlaneseq
    %v187 = vshrl.u32 %v186, 7
    %v188 = vsub.s32 7, %v187
    %v189 = vrot.slane %v54, %v188
    %191 = vbcast.lane.b32.xlu0 %v189, 256
    %v192 = vpop.permute.xlu0 %191
    %v193 = vmul.f32 %v129, %v143
    %v194 = vmul.f32 %v130, %v150
    %v195 = vmul.f32 %v131, %v157
    %v196 = vmul.f32 %v132, %v164
    %v197 = vmul.f32 %v133, %v171
    %v198 = vmul.f32 %v134, %v178
    %v199 = vmul.f32 %v135, %v185
    %v200 = vmul.f32 %v136, %v192
    %vm201 = vcmask 261120
    %v202 = vsel %vm201, %v193, 0.0
    %v203 = vrot.slane %v202, 4
    %v204 = vadd.f32 %v202, %v203
    %v205 = vrot.slane %v204, 2
    %v206 = vadd.f32 %v204, %v205
    %v207 = vrot.slane %v206, 1
    %v208 = vadd.f32 %v206, %v207
    %v209 = vsel %vm201, %v194, 0.0
    %v210 = vrot.slane %v209, 4
    %v211 = vadd.f32 %v209, %v210
    %v212 = vrot.slane %v211, 2
    %v213 = vadd.f32 %v211, %v212
    %v214 = vrot.slane %v213, 1
    %v215 = vadd.f32 %v213, %v214
    %v216 = vsel %vm201, %v195, 0.0
    %v217 = vrot.slane %v216, 4
    %v218 = vadd.f32 %v216, %v217
    %v219 = vrot.slane %v218, 2
    %v220 = vadd.f32 %v218, %v219
    %v221 = vrot.slane %v220, 1
    %v222 = vadd.f32 %v220, %v221
    %v223 = vsel %vm201, %v196, 0.0
    %v224 = vrot.slane %v223, 4
    %v225 = vadd.f32 %v223, %v224
    %v226 = vrot.slane %v225, 2
    %v227 = vadd.f32 %v225, %v226
    %v228 = vrot.slane %v227, 1
    %v229 = vadd.f32 %v227, %v228
    %v230 = vsel %vm201, %v197, 0.0
    %v231 = vrot.slane %v230, 4
    %v232 = vadd.f32 %v230, %v231
    %v233 = vrot.slane %v232, 2
    %v234 = vadd.f32 %v232, %v233
    %v235 = vrot.slane %v234, 1
    %v236 = vadd.f32 %v234, %v235
    %v237 = vsel %vm201, %v198, 0.0
    %v238 = vrot.slane %v237, 4
    %v239 = vadd.f32 %v237, %v238
    %v240 = vrot.slane %v239, 2
    %v241 = vadd.f32 %v239, %v240
    %v242 = vrot.slane %v241, 1
    %v243 = vadd.f32 %v241, %v242
    %v244 = vsel %vm201, %v199, 0.0
    %v245 = vrot.slane %v244, 4
    %v246 = vadd.f32 %v244, %v245
    %v247 = vrot.slane %v246, 2
    %v248 = vadd.f32 %v246, %v247
    %v249 = vrot.slane %v248, 1
    %v250 = vadd.f32 %v248, %v249
    %v251 = vsel %vm201, %v200, 0.0
    %v252 = vrot.slane %v251, 4
    %v253 = vadd.f32 %v251, %v252
    %v254 = vrot.slane %v253, 2
    %v255 = vadd.f32 %v253, %v254
    %v256 = vrot.slane %v255, 1
    %v257 = vadd.f32 %v255, %v256
    %v258 = vpack.c.bf16 %v208, %v208
    %v259 = vpack.c.bf16 %v215, %v215
    %v260 = vpack.c.bf16 %v222, %v222
    %v261 = vpack.c.bf16 %v229, %v229
    %v262 = vpack.c.bf16 %v236, %v236
    %v263 = vpack.c.bf16 %v243, %v243
    %v264 = vpack.c.bf16 %v250, %v250
    %v265 = vpack.c.bf16 %v257, %v257
    %v266 = vld [vmem:[#allocation7] sm:$0xf]
    %v267 = vld [vmem:[#allocation7 + $0x4] sm:$0xf]
    %v268 = vld [vmem:[#allocation7 + $0x8] sm:$0xf]
    %v269 = vld [vmem:[#allocation7 + $0xc] sm:$0xf]
    %v278 = vunpack.c.l.b16 %v258
    %v279 = vunpack.c.l.b16 %v259
    %v280 = vunpack.c.l.b16 %v260
    %v281 = vunpack.c.l.b16 %v261
    %v282 = vunpack.c.l.b16 %v262
    %v283 = vunpack.c.l.b16 %v263
    %v284 = vunpack.c.l.b16 %v264
    %v285 = vunpack.c.l.b16 %v265
    %vm286 = vcmask 1041409
    %v287 = vsel %vm286, %v279, %v278
    %vm288 = vcmask 1042434
    %v289 = vsel %vm288, %v280, %v287
    %vm290 = vcmask 1043459
    %v291 = vsel %vm290, %v281, %v289
    %vm292 = vcmask 1044484
    %v293 = vsel %vm292, %v282, %v291
    %vm294 = vcmask 1045509
    %v295 = vsel %vm294, %v283, %v293
    %vm296 = vcmask 1046534
    %v297 = vsel %vm296, %v284, %v295
    %vm298 = vcmask 1047559
    %v299 = vsel %vm298, %v285, %v297
    %v300 = vpack.c.b16 %v299, %v299
    %v305 = vunpack.c.l.b16 %v266
    %v306 = vunpack.c.l.b16 %v267
    %v307 = vunpack.c.l.b16 %v268
    %v308 = vunpack.c.l.b16 %v269
    %v309 = vpack.c.b16 %v306, %v305
    %v310 = vpack.c.b16 %v308, %v307
    %v314 = vsel %vm201, %v300, 0
    %316 = vmatprep.subr.bf16.mxu0 0
    %317 = vmatpush1.bf16.msra.mxu0 %v309
    %318 = vmatprep.subr.bf16.mxu0 0
    %319 = vmatpush1.bf16.msra.mxu0 %v310
    %320 = vmatprep.subr.bf16.mxu0 0
    %321 = vmatpush1.bf16.msra.mxu0 0
    %322 = vmatprep.subr.bf16.mxu0 0
    %323 = vmatpush1.bf16.msra.mxu0 0
    %324 = vmatprep.subr.bf16.mxu0 0
    %325 = vmatpush1.bf16.msra.mxu0 0
    %326 = vmatprep.subr.bf16.mxu0 0
    %327 = vmatpush1.bf16.msra.mxu0 0
    %328 = vmatprep.subr.bf16.mxu0 0
    %329 = vmatpush1.bf16.msra.mxu0 0
    %330 = vmatprep.subr.bf16.mxu0 0
    %331 = vmatpush1.bf16.msra.mxu0 0
    %332 = vmatprep.subr.bf16.mxu0 0
    %333 = vmatpush1.bf16.msra.mxu0 0
    %334 = vmatprep.subr.bf16.mxu0 0
    %335 = vmatpush1.bf16.msra.mxu0 0
    %336 = vmatprep.subr.bf16.mxu0 0
    %337 = vmatpush1.bf16.msra.mxu0 0
    %338 = vmatprep.subr.bf16.mxu0 0
    %339 = vmatpush1.bf16.msra.mxu0 0
    %340 = vmatprep.subr.bf16.mxu0 0
    %341 = vmatpush1.bf16.msra.mxu0 0
    %342 = vmatprep.subr.bf16.mxu0 0
    %343 = vmatpush1.bf16.msra.mxu0 0
    %344 = vmatprep.subr.bf16.mxu0 0
    %345 = vmatpush1.bf16.msra.mxu0 0
    %346 = vmatprep.subr.bf16.mxu0 0
    %347 = vmatpush1.bf16.msra.mxu0 0
    %348 = vmatprep.mubr.bf16.mxu0 0
    %349 = vmatmul.mubr.bf16.gmra.mrb[0].mxu0 %v314
    %v350 = vpop.f32.mrb[0].mxu0
    %v351 = vadd.f32 0.0, %v350
    %v352 = vpop.f32.mrb[0].mxu0
    %v353 = vpop.f32.mrb[0].mxu0
    %v354 = vpop.f32.mrb[0].mxu0
    %355 = vdwg.mxu0
    %vm356 = vcmask 64512
    %v357 = vsel %vm356, %v54, 0.0
    %358 = vadd.xlane.f32.xlu0 %v357
    %v359 = vpop.xlane.xlu0 %358
    %v360 = vmax.f32 %v359, 1.0
    %v361 = vrcp.pop %v360
    %v362 = vmul.f32 1.0, %v361
    %v363 = vmul.f32 %v351, %v362
    %364 = vst [vmem:[#allocation8] sm:$0xff] %v363
    // Predicated region
    $region26: #{tpu_custom_call.1} parent=1 // pred_check
      _
    $region27: #{tpu_custom_call.1} parent=1 // pred_check_branch
      %366 = sbr.rel (0) target = $region29
    $region28: #{tpu_custom_call.1} parent=1 // pred_region
      %s368 = ssub.s32 128, 128
      %369 = vsyncadd [#allocation4], %s368
      %s371 = sshll.u32 [#allocation8], 4
      %s372 = int_to_ptr.vmem [resolvable:$true] %s371
      %374 = dma.vmem_to_hbm [thread:$0]  %s372, 128, %s3, [#allocation4]
    $region29: #{tpu_custom_call.1} parent=1 // pred_fallthru
      _
    // Predicated region
    $region30: #{tpu_custom_call.1} parent=1 // pred_check
      _
    $region31: #{tpu_custom_call.1} parent=1 // pred_check_branch
      %376 = sbr.rel (0) target = $region33
    $region32: #{tpu_custom_call.1} parent=1 // pred_region
      %377 = dma.done [#allocation4], 128
    $region33: #{tpu_custom_call.1} parent=1 // pred_fallthru
      _
    %378 = vsyncpa [#allocation3], 1
    %379 = vsyncpa [#allocation6], 1
    %380 = vsyncpa [#allocation4], 1

</llo_original>
